<compile_context>
chip_gen: v5e
topology: v5e:2x2
jax: 0.10.0
libtpu: 0.0.40
codegen_flags: <defaults>
</compile_context>

<pallas_src>
import jax
import jax.numpy as jnp
from jax.experimental import pallas as pl
from jax.experimental.pallas import tpu as pltpu

# ----- model hyper-parameters (small stand-in sizes, consistent with module) --
B = 2                         # batch
C_IN = 3                      # RGB input channels (ResNet expects 3)
H = W = 16                    # spatial size
KH = KW = 3                   # conv kernel
HO, WO = H - KH + 1, W - KW + 1          # 14, 14
N_POOL = HO * WO                          # rows per (image, batch) segment
R = 2 * B * N_POOL                        # im2col rows for BOTH images stacked
K_RAW = KH * KW * C_IN                    # 27
K_PAD = 32                                # lane-friendly contraction dim
C_FEAT = 128                  # "lastlayer_in" analogue (real ResNet-152: 2048)
SIM_DIMS = 32                 # similarity_dims (fc out features)
DECAY = 0.5                   # CNN.PARAM_DISTANCE_DECAY_RATE (== sqrt)
EPS = 1e-6                    # torch pairwise_distance default eps


# ----------------------------- fused Pallas kernel ----------------------------
def _fused_cnn_kernel(patch_ref, wconv_ref, bconv_ref, pdiff_ref, wfc_ref, o_ref):
    """Full forward pass for both images in one launch.

    patch_ref: (R, K_PAD)         bf16  im2col patches, img1 rows then img2 rows
    wconv_ref: (K_PAD, C_FEAT)    bf16  zero-padded flattened conv weight
    bconv_ref: (1, C_FEAT)        f32   conv bias
    pdiff_ref: (B, R)             bf16  +1 on img1_b segment, -1 on img2_b segment
    wfc_ref:   (C_FEAT, SIM_DIMS) bf16  trainable fc weight (bias cancels in diff)
    o_ref:     (B, 128)           f32   similarity broadcast along the lane dim
    """
    # Frozen-backbone stand-in: conv-as-matmul (bf16 MXU, f32 acc) + bias + ReLU.
    y = jnp.dot(patch_ref[...], wconv_ref[...],
                preferred_element_type=jnp.float32)
    y = jnp.maximum(y + bconv_ref[...], 0.0)                       # (R, C_FEAT) f32

    # Fused global-average-pool + image pairing:
    #   diff[b] = mean_rows(y[img1_b]) - mean_rows(y[img2_b])
    # via one bf16 matmul with an exact +-1/0 matrix and an f32 post-scale.
    diff = jnp.dot(pdiff_ref[...], y.astype(jnp.bfloat16),
                   preferred_element_type=jnp.float32) * (1.0 / N_POOL)  # (B, C_FEAT)

    # Trainable fc head applied to the embedding difference (fc bias cancels).
    dvec = jnp.dot(diff.astype(jnp.bfloat16), wfc_ref[...],
                   preferred_element_type=jnp.float32)             # (B, SIM_DIMS)

    # exp_manhattan_distance: 1 - exp(-(||e1 - e2 + eps||_1 ** 0.5)).
    d = jnp.sum(jnp.abs(dvec + EPS), axis=-1, keepdims=True)       # (B, 1)
    sim = 1.0 - jnp.exp(-jnp.sqrt(d))                              # sqrt == pow(.,0.5)
    o_ref[...] = jnp.broadcast_to(sim, o_ref.shape)                # lane-dense store


# ------------------------------- JAX glue -------------------------------------
class CNNPallas:
    """Pallas port of the CNN similarity module (L1_SIMILARITY head)."""

    def __init__(self, key):
        k1, k2, k3, k4 = jax.random.split(key, 4)
        # frozen "backbone" conv (stands in for the pretrained ResNet-152)
        w = jax.random.normal(k1, (KH, KW, C_IN, C_FEAT), jnp.float32) * 0.1
        w = w.reshape(K_RAW, C_FEAT)
        w = jnp.pad(w, ((0, K_PAD - K_RAW), (0, 0)))           # zero-pad K 27->32
        self.w_conv = w.astype(jnp.bfloat16)
        self.b_conv = jax.random.normal(k2, (1, C_FEAT), jnp.float32) * 0.1
        # trainable fc: Linear(lastlayer_in, similarity_dims)
        self.w_fc = (jax.random.normal(k3, (C_FEAT, SIM_DIMS), jnp.float32)
                     * 0.05).astype(jnp.bfloat16)
        # fc bias exists in the module but cancels exactly in (emb1 - emb2),
        # so it is never passed to the kernel.
        self.b_fc = jax.random.normal(k4, (1, SIM_DIMS), jnp.float32) * 0.05
        # Precomputed pool+pair difference matrix: +1 on img1_b rows, -1 on
        # img2_b rows (exact in bf16); 1/N_POOL is applied in f32 in-kernel.
        row = jnp.arange(B, dtype=jnp.int32)[:, None]           # (B, 1)
        seg = jnp.arange(R, dtype=jnp.int32)[None, :] // N_POOL  # (1, R)
        pdiff = (jnp.where(seg == row, 1.0, 0.0)
                 - jnp.where(seg == row + B, 1.0, 0.0))
        self.pool_diff = pdiff.astype(jnp.bfloat16)              # (B, R)
        # jit the whole forward (glue + single pallas_call); params are
        # closure constants baked into the executable.
        self._forward = jax.jit(self._forward_impl)

    def _forward_impl(self, img1_nchw, img2_nchw):
        # Stack both images, go NHWC, and cast to bf16 BEFORE the im2col
        # slicing so all layout work runs at half the bytes.
        x = jnp.concatenate([img1_nchw, img2_nchw], axis=0)       # (2B, C, H, W)
        x = jnp.transpose(x, (0, 2, 3, 1)).astype(jnp.bfloat16)   # (2B, H, W, C)
        # im2col written directly into a lane-padded (R, K_PAD) bf16 slab:
        # 9 shifted views + one zero block, single concatenate + reshape.
        cols = [x[:, kh:kh + HO, kw:kw + WO, :]
                for kh in range(KH) for kw in range(KW)]
        cols.append(jnp.zeros((2 * B, HO, WO, K_PAD - K_RAW), jnp.bfloat16))
        patches = jnp.concatenate(cols, axis=-1).reshape(R, K_PAD)  # (R, 32)

        vmem_spec = lambda: pl.BlockSpec(memory_space=pltpu.MemorySpace.VMEM)
        sim = pl.pallas_call(
            _fused_cnn_kernel,
            out_shape=jax.ShapeDtypeStruct((B, 128), jnp.float32),
            in_specs=[vmem_spec() for _ in range(5)],
            out_specs=vmem_spec(),
        )(patches, self.w_conv, self.b_conv, self.pool_diff, self.w_fc)
        return sim[:, 0]                   # (B,), matches torch output shape

    def forward(self, img1, img2):
        return self._forward(img1, img2)


# --------------------------------- main ----------------------------------------
if __name__ == "__main__":
    key = jax.random.PRNGKey(0)
    k_model, k_img1, k_img2 = jax.random.split(key, 3)

    model = CNNPallas(k_model)
    img1 = jax.random.normal(k_img1, (B, C_IN, H, W), jnp.float32)  # NCHW
    img2 = jax.random.normal(k_img2, (B, C_IN, H, W), jnp.float32)  # NCHW

    out = model.forward(img1, img2)
    out = jax.block_until_ready(out)

    assert out.shape == (B,)
    assert bool(jnp.all(jnp.isfinite(out)))
    assert bool(jnp.all((out >= 0.0) & (out <= 1.0)))   # 1 - exp(-d) ∈ [0, 1)
    print("KERNEL_OK")
</pallas_src>

<mosaic_0001>
module attributes {stable_mosaic.version = 11 : i64} {
  func.func @_fused_cnn_kernel(%arg0: memref<784x32xbf16, #tpu.memory_space<vmem>>, %arg1: memref<32x128xbf16, #tpu.memory_space<vmem>>, %arg2: memref<1x128xf32, #tpu.memory_space<vmem>>, %arg3: memref<2x784xbf16, #tpu.memory_space<vmem>>, %arg4: memref<128x32xbf16, #tpu.memory_space<vmem>>, %arg5: memref<2x128xf32, #tpu.memory_space<vmem>>) attributes {dimension_semantics = [], scalar_prefetch = 0 : i64, scratch_operands = 0 : i64, tpu.core_type = #tpu.core_type<tc>} {
    %c0 = arith.constant 0 : index
    %c0_0 = arith.constant 0 : index
    %0 = vector.load %arg0[%c0, %c0_0] : memref<784x32xbf16, #tpu.memory_space<vmem>>, vector<784x32xbf16>
    %c0_1 = arith.constant 0 : index
    %c0_2 = arith.constant 0 : index
    %1 = vector.load %arg1[%c0_1, %c0_2] : memref<32x128xbf16, #tpu.memory_space<vmem>>, vector<32x128xbf16>
    %cst = arith.constant dense<0.000000e+00> : vector<784x128xf32>
    %2 = tpu.matmul %0, %1, %cst {dimension_numbers = #tpu.dot_dimension_numbers<[1], [0], [0], [1], [0, 0, 1, 1], [], []>} : vector<784x32xbf16>, vector<32x128xbf16>, vector<784x128xf32> -> vector<784x128xf32>
    %c0_3 = arith.constant 0 : index
    %c0_4 = arith.constant 0 : index
    %3 = vector.load %arg2[%c0_3, %c0_4] : memref<1x128xf32, #tpu.memory_space<vmem>>, vector<1x128xf32>
    %4 = vector.broadcast %3 : vector<1x128xf32> to vector<784x128xf32>
    %5 = arith.addf %2, %4 : vector<784x128xf32>
    %cst_5 = arith.constant 0.000000e+00 : f32
    %6 = vector.broadcast %cst_5 : f32 to vector<784x128xf32>
    %7 = arith.maximumf %5, %6 : vector<784x128xf32>
    %c0_6 = arith.constant 0 : index
    %c0_7 = arith.constant 0 : index
    %8 = vector.load %arg3[%c0_6, %c0_7] : memref<2x784xbf16, #tpu.memory_space<vmem>>, vector<2x784xbf16>
    %9 = arith.truncf %7 : vector<784x128xf32> to vector<784x128xbf16>
    %cst_8 = arith.constant dense<0.000000e+00> : vector<2x128xf32>
    %10 = tpu.matmul %8, %9, %cst_8 {dimension_numbers = #tpu.dot_dimension_numbers<[1], [0], [0], [1], [0, 0, 1, 1], [], []>} : vector<2x784xbf16>, vector<784x128xbf16>, vector<2x128xf32> -> vector<2x128xf32>
    %cst_9 = arith.constant 0.00510204071 : f32
    %11 = vector.broadcast %cst_9 : f32 to vector<2x128xf32>
    %12 = arith.mulf %10, %11 : vector<2x128xf32>
    %13 = arith.truncf %12 : vector<2x128xf32> to vector<2x128xbf16>
    %c0_10 = arith.constant 0 : index
    %c0_11 = arith.constant 0 : index
    %14 = vector.load %arg4[%c0_10, %c0_11] : memref<128x32xbf16, #tpu.memory_space<vmem>>, vector<128x32xbf16>
    %cst_12 = arith.constant dense<0.000000e+00> : vector<2x32xf32>
    %15 = tpu.matmul %13, %14, %cst_12 {dimension_numbers = #tpu.dot_dimension_numbers<[1], [0], [0], [1], [0, 0, 1, 1], [], []>} : vector<2x128xbf16>, vector<128x32xbf16>, vector<2x32xf32> -> vector<2x32xf32>
    %cst_13 = arith.constant 9.99999997E-7 : f32
    %16 = vector.broadcast %cst_13 : f32 to vector<2x32xf32>
    %17 = arith.addf %15, %16 : vector<2x32xf32>
    %18 = math.absf %17 : vector<2x32xf32>
    %cst_14 = arith.constant dense<0.000000e+00> : vector<2xf32>
    %19 = vector.multi_reduction <add>, %18, %cst_14 [1] : vector<2x32xf32> to vector<2xf32>
    %20 = vector.shape_cast %19 : vector<2xf32> to vector<2x1xf32>
    %21 = math.sqrt %20 : vector<2x1xf32>
    %cst_15 = arith.constant 0.000000e+00 : f32
    %22 = vector.broadcast %cst_15 : f32 to vector<2x1xf32>
    %23 = arith.subf %22, %21 : vector<2x1xf32>
    %24 = math.exp %23 : vector<2x1xf32>
    %cst_16 = arith.constant 1.000000e+00 : f32
    %25 = vector.broadcast %cst_16 : f32 to vector<2x1xf32>
    %26 = arith.subf %25, %24 : vector<2x1xf32>
    %27 = vector.shape_cast %26 : vector<2x1xf32> to vector<2x1xf32>
    %28 = vector.broadcast %27 : vector<2x1xf32> to vector<2x128xf32>
    %c0_17 = arith.constant 0 : index
    %c0_18 = arith.constant 0 : index
    %29 = vector.load %arg5[%c0_17, %c0_18] : memref<2x128xf32, #tpu.memory_space<vmem>>, vector<2x128xf32>
    tpu.vector_store %arg5[%c0_17, %c0_18], %28 {strides = array<i32>} : memref<2x128xf32, #tpu.memory_space<vmem>>, vector<2x128xf32>,
    return
  }
}

</mosaic_0001>

<llo_original>
// kernel: _forward_impl.1
$region0: #{_forward_impl.1}
  #allocation0 [shape = 'u32[]', space=smem, size = 0x4, offset = 0x4, fixed_abs, tag = 'smem constant byte address 0x4 - core index']
  #allocation1 [shape = 'u32[72,128]{1,0:T(1,128)}', space=vmem, size = 0x9000, scoped, tag = 'internal scratch']
  %s0 = inlined_call_operand.vmem [shape: bf16[784,32], index: 0, kind: input, shape index: {}]
  %s1 = inlined_call_operand.vmem [shape: bf16[32,128], index: 1, kind: input, shape index: {}]
  %s2 = inlined_call_operand.vmem [shape: f32[1,128], index: 2, kind: input, shape index: {}]
  %s3 = inlined_call_operand.vmem [shape: bf16[2,784], index: 3, kind: input, shape index: {}]
  %s4 = inlined_call_operand.vmem [shape: bf16[128,32], index: 4, kind: input, shape index: {}]
  %s5 = inlined_call_operand.vmem [shape: f32[2,128], index: 5, kind: output, shape index: {}]
  %s6 = sld [smem:[#allocation0]]
  $region30: #{_forward_impl.1} parent=0
    _
  %s8 = ssub.s32 1, %s6
  %s9 = scalar_select 0, %s8, %s6
  // Predicated region
  $region2: #{_forward_impl.1} parent=0 // pred_check
    _
  $region3: #{_forward_impl.1} parent=0 // pred_check_branch
    %11 = sbr.rel (0) target = $region5
  $region4: #{_forward_impl.1} parent=0 // pred_region
    _
  $region5: #{_forward_impl.1} parent=0 // pred_fallthru
    _
  // Predicated region
  $region6: #{_forward_impl.1} parent=0 // pred_check
    _
  $region7: #{_forward_impl.1} parent=0 // pred_check_branch
    %13 = sbr.rel (0) target = $region9
  $region8: #{_forward_impl.1} parent=0 // pred_region
    _
  $region9: #{_forward_impl.1} parent=0 // pred_fallthru
    _
  // Predicated region
  $region10: #{_forward_impl.1} parent=0 // pred_check
    _
  $region11: #{_forward_impl.1} parent=0 // pred_check_branch
    %15 = sbr.rel (0) target = $region13
  $region12: #{_forward_impl.1} parent=0 // pred_region
    _
  $region13: #{_forward_impl.1} parent=0 // pred_fallthru
    _
  // Predicated region
  $region14: #{_forward_impl.1} parent=0 // pred_check
    _
  $region15: #{_forward_impl.1} parent=0 // pred_check_branch
    %17 = sbr.rel (0) target = $region17
  $region16: #{_forward_impl.1} parent=0 // pred_region
    _
  $region17: #{_forward_impl.1} parent=0 // pred_fallthru
    _
  // Predicated region
  $region18: #{_forward_impl.1} parent=0 // pred_check
    _
  $region19: #{_forward_impl.1} parent=0 // pred_check_branch
    %19 = sbr.rel (0) target = $region21
  $region20: #{_forward_impl.1} parent=0 // pred_region
    _
  $region21: #{_forward_impl.1} parent=0 // pred_fallthru
    _
  %v21 = vld [vmem:[%s0] sm:$0xf]
  %v22 = vld [vmem:[%s0 + $0x4] sm:$0xf]
  %v23 = vld [vmem:[%s0 + $0x8] sm:$0xf]
  %v24 = vld [vmem:[%s0 + $0xc] sm:$0xf]
  %v25 = vld [vmem:[%s0 + $0x10] sm:$0xf]
  %v26 = vld [vmem:[%s0 + $0x14] sm:$0xf]
  %v27 = vld [vmem:[%s0 + $0x18] sm:$0xf]
  %v28 = vld [vmem:[%s0 + $0x1c] sm:$0xf]
  %v29 = vld [vmem:[%s0 + $0x20] sm:$0xf]
  %v30 = vld [vmem:[%s0 + $0x24] sm:$0xf]
  %v31 = vld [vmem:[%s0 + $0x28] sm:$0xf]
  %v32 = vld [vmem:[%s0 + $0x2c] sm:$0xf]
  %v33 = vld [vmem:[%s0 + $0x30] sm:$0xf]
  %v34 = vld [vmem:[%s0 + $0x34] sm:$0xf]
  %v35 = vld [vmem:[%s0 + $0x38] sm:$0xf]
  %v36 = vld [vmem:[%s0 + $0x3c] sm:$0xf]
  %v37 = vld [vmem:[%s0 + $0x40] sm:$0xf]
  %v38 = vld [vmem:[%s0 + $0x44] sm:$0xf]
  %v39 = vld [vmem:[%s0 + $0x48] sm:$0xf]
  %v40 = vld [vmem:[%s0 + $0x4c] sm:$0xf]
  %v41 = vld [vmem:[%s0 + $0x50] sm:$0xf]
  %v42 = vld [vmem:[%s0 + $0x54] sm:$0xf]
  %v43 = vld [vmem:[%s0 + $0x58] sm:$0xf]
  %v44 = vld [vmem:[%s0 + $0x5c] sm:$0xf]
  %v45 = vld [vmem:[%s0 + $0x60] sm:$0xf]
  %v46 = vld [vmem:[%s0 + $0x64] sm:$0xf]
  %v47 = vld [vmem:[%s0 + $0x68] sm:$0xf]
  %v48 = vld [vmem:[%s0 + $0x6c] sm:$0xf]
  %v49 = vld [vmem:[%s0 + $0x70] sm:$0xf]
  %v50 = vld [vmem:[%s0 + $0x74] sm:$0xf]
  %v51 = vld [vmem:[%s0 + $0x78] sm:$0xf]
  %v52 = vld [vmem:[%s0 + $0x7c] sm:$0xf]
  %v53 = vld [vmem:[%s0 + $0x80] sm:$0xf]
  %v54 = vld [vmem:[%s0 + $0x84] sm:$0xf]
  %v55 = vld [vmem:[%s0 + $0x88] sm:$0xf]
  %v56 = vld [vmem:[%s0 + $0x8c] sm:$0xf]
  %v57 = vld [vmem:[%s0 + $0x90] sm:$0xf]
  %v58 = vld [vmem:[%s0 + $0x94] sm:$0xf]
  %v59 = vld [vmem:[%s0 + $0x98] sm:$0xf]
  %v60 = vld [vmem:[%s0 + $0x9c] sm:$0xf]
  %v61 = vld [vmem:[%s0 + $0xa0] sm:$0xf]
  %v62 = vld [vmem:[%s0 + $0xa4] sm:$0xf]
  %v63 = vld [vmem:[%s0 + $0xa8] sm:$0xf]
  %v64 = vld [vmem:[%s0 + $0xac] sm:$0xf]
  %v65 = vld [vmem:[%s0 + $0xb0] sm:$0xf]
  %v66 = vld [vmem:[%s0 + $0xb4] sm:$0xf]
  %v67 = vld [vmem:[%s0 + $0xb8] sm:$0xf]
  %v68 = vld [vmem:[%s0 + $0xbc] sm:$0xf]
  %v69 = vld [vmem:[%s0 + $0xc0] sm:$0xf]
  %v70 = vld [vmem:[%s0 + $0xc4] sm:$0xf]
  %v71 = vld [vmem:[%s0 + $0xc8] sm:$0xf]
  %v72 = vld [vmem:[%s0 + $0xcc] sm:$0xf]
  %v73 = vld [vmem:[%s0 + $0xd0] sm:$0xf]
  %v74 = vld [vmem:[%s0 + $0xd4] sm:$0xf]
  %v75 = vld [vmem:[%s0 + $0xd8] sm:$0xf]
  %v76 = vld [vmem:[%s0 + $0xdc] sm:$0xf]
  %v77 = vld [vmem:[%s0 + $0xe0] sm:$0xf]
  %v78 = vld [vmem:[%s0 + $0xe4] sm:$0xf]
  %v79 = vld [vmem:[%s0 + $0xe8] sm:$0xf]
  %v80 = vld [vmem:[%s0 + $0xec] sm:$0xf]
  %v81 = vld [vmem:[%s0 + $0xf0] sm:$0xf]
  %v82 = vld [vmem:[%s0 + $0xf4] sm:$0xf]
  %v83 = vld [vmem:[%s0 + $0xf8] sm:$0xf]
  %v84 = vld [vmem:[%s0 + $0xfc] sm:$0xf]
  %v85 = vld [vmem:[%s0 + $0x100] sm:$0xf]
  %v86 = vld [vmem:[%s0 + $0x104] sm:$0xf]
  %v87 = vld [vmem:[%s0 + $0x108] sm:$0xf]
  %v88 = vld [vmem:[%s0 + $0x10c] sm:$0xf]
  %v89 = vld [vmem:[%s0 + $0x110] sm:$0xf]
  %v90 = vld [vmem:[%s0 + $0x114] sm:$0xf]
  %v91 = vld [vmem:[%s0 + $0x118] sm:$0xf]
  %v92 = vld [vmem:[%s0 + $0x11c] sm:$0xf]
  %v93 = vld [vmem:[%s0 + $0x120] sm:$0xf]
  %v94 = vld [vmem:[%s0 + $0x124] sm:$0xf]
  %v95 = vld [vmem:[%s0 + $0x128] sm:$0xf]
  %v96 = vld [vmem:[%s0 + $0x12c] sm:$0xf]
  %v97 = vld [vmem:[%s0 + $0x130] sm:$0xf]
  %v98 = vld [vmem:[%s0 + $0x134] sm:$0xf]
  %v99 = vld [vmem:[%s0 + $0x138] sm:$0xf]
  %v100 = vld [vmem:[%s0 + $0x13c] sm:$0xf]
  %v101 = vld [vmem:[%s0 + $0x140] sm:$0xf]
  %v102 = vld [vmem:[%s0 + $0x144] sm:$0xf]
  %v103 = vld [vmem:[%s0 + $0x148] sm:$0xf]
  %v104 = vld [vmem:[%s0 + $0x14c] sm:$0xf]
  %v105 = vld [vmem:[%s0 + $0x150] sm:$0xf]
  %v106 = vld [vmem:[%s0 + $0x154] sm:$0xf]
  %v107 = vld [vmem:[%s0 + $0x158] sm:$0xf]
  %v108 = vld [vmem:[%s0 + $0x15c] sm:$0xf]
  %v109 = vld [vmem:[%s0 + $0x160] sm:$0xf]
  %v110 = vld [vmem:[%s0 + $0x164] sm:$0xf]
  %v111 = vld [vmem:[%s0 + $0x168] sm:$0xf]
  %v112 = vld [vmem:[%s0 + $0x16c] sm:$0xf]
  %v113 = vld [vmem:[%s0 + $0x170] sm:$0xf]
  %v114 = vld [vmem:[%s0 + $0x174] sm:$0xf]
  %v115 = vld [vmem:[%s0 + $0x178] sm:$0xf]
  %v116 = vld [vmem:[%s0 + $0x17c] sm:$0xf]
  %v117 = vld [vmem:[%s0 + $0x180] sm:$0xf]
  %v118 = vld [vmem:[%s0 + $0x184] sm:$0xf]
  %v119 = vld [vmem:[%s1] sm:$0xf]
  %v120 = vld [vmem:[%s1 + $0x4] sm:$0xf]
  %v121 = vld [vmem:[%s1 + $0x8] sm:$0xf]
  %v122 = vld [vmem:[%s1 + $0xc] sm:$0xf]
  %v123 = vld [vmem:[%s2] sm:$0x1]
  %v125 = vperm.slane %v123, 0
  %v225 = vunpack.c.l.b16 %v21
  %v226 = vunpack.c.l.b16 %v22
  %v227 = vunpack.c.l.b16 %v23
  %v228 = vunpack.c.l.b16 %v24
  %v229 = vunpack.c.l.b16 %v25
  %v230 = vunpack.c.l.b16 %v26
  %v231 = vunpack.c.l.b16 %v27
  %v232 = vunpack.c.l.b16 %v28
  %v233 = vunpack.c.l.b16 %v29
  %v234 = vunpack.c.l.b16 %v30
  %v235 = vunpack.c.l.b16 %v31
  %v236 = vunpack.c.l.b16 %v32
  %v237 = vunpack.c.l.b16 %v33
  %v238 = vunpack.c.l.b16 %v34
  %v239 = vunpack.c.l.b16 %v35
  %v240 = vunpack.c.l.b16 %v36
  %v241 = vunpack.c.l.b16 %v37
  %v242 = vunpack.c.l.b16 %v38
  %v243 = vunpack.c.l.b16 %v39
  %v244 = vunpack.c.l.b16 %v40
  %v245 = vunpack.c.l.b16 %v41
  %v246 = vunpack.c.l.b16 %v42
  %v247 = vunpack.c.l.b16 %v43
  %v248 = vunpack.c.l.b16 %v44
  %v249 = vunpack.c.l.b16 %v45
  %v250 = vunpack.c.l.b16 %v46
  %v251 = vunpack.c.l.b16 %v47
  %v252 = vunpack.c.l.b16 %v48
  %v253 = vunpack.c.l.b16 %v49
  %v254 = vunpack.c.l.b16 %v50
  %v255 = vunpack.c.l.b16 %v51
  %v256 = vunpack.c.l.b16 %v52
  %v257 = vunpack.c.l.b16 %v53
  %v258 = vunpack.c.l.b16 %v54
  %v259 = vunpack.c.l.b16 %v55
  %v260 = vunpack.c.l.b16 %v56
  %v261 = vunpack.c.l.b16 %v57
  %v262 = vunpack.c.l.b16 %v58
  %v263 = vunpack.c.l.b16 %v59
  %v264 = vunpack.c.l.b16 %v60
  %v265 = vunpack.c.l.b16 %v61
  %v266 = vunpack.c.l.b16 %v62
  %v267 = vunpack.c.l.b16 %v63
  %v268 = vunpack.c.l.b16 %v64
  %v269 = vunpack.c.l.b16 %v65
  %v270 = vunpack.c.l.b16 %v66
  %v271 = vunpack.c.l.b16 %v67
  %v272 = vunpack.c.l.b16 %v68
  %v273 = vunpack.c.l.b16 %v69
  %v274 = vunpack.c.l.b16 %v70
  %v275 = vunpack.c.l.b16 %v71
  %v276 = vunpack.c.l.b16 %v72
  %v277 = vunpack.c.l.b16 %v73
  %v278 = vunpack.c.l.b16 %v74
  %v279 = vunpack.c.l.b16 %v75
  %v280 = vunpack.c.l.b16 %v76
  %v281 = vunpack.c.l.b16 %v77
  %v282 = vunpack.c.l.b16 %v78
  %v283 = vunpack.c.l.b16 %v79
  %v284 = vunpack.c.l.b16 %v80
  %v285 = vunpack.c.l.b16 %v81
  %v286 = vunpack.c.l.b16 %v82
  %v287 = vunpack.c.l.b16 %v83
  %v288 = vunpack.c.l.b16 %v84
  %v289 = vunpack.c.l.b16 %v85
  %v290 = vunpack.c.l.b16 %v86
  %v291 = vunpack.c.l.b16 %v87
  %v292 = vunpack.c.l.b16 %v88
  %v293 = vunpack.c.l.b16 %v89
  %v294 = vunpack.c.l.b16 %v90
  %v295 = vunpack.c.l.b16 %v91
  %v296 = vunpack.c.l.b16 %v92
  %v297 = vunpack.c.l.b16 %v93
  %v298 = vunpack.c.l.b16 %v94
  %v299 = vunpack.c.l.b16 %v95
  %v300 = vunpack.c.l.b16 %v96
  %v301 = vunpack.c.l.b16 %v97
  %v302 = vunpack.c.l.b16 %v98
  %v303 = vunpack.c.l.b16 %v99
  %v304 = vunpack.c.l.b16 %v100
  %v305 = vunpack.c.l.b16 %v101
  %v306 = vunpack.c.l.b16 %v102
  %v307 = vunpack.c.l.b16 %v103
  %v308 = vunpack.c.l.b16 %v104
  %v309 = vunpack.c.l.b16 %v105
  %v310 = vunpack.c.l.b16 %v106
  %v311 = vunpack.c.l.b16 %v107
  %v312 = vunpack.c.l.b16 %v108
  %v313 = vunpack.c.l.b16 %v109
  %v314 = vunpack.c.l.b16 %v110
  %v315 = vunpack.c.l.b16 %v111
  %v316 = vunpack.c.l.b16 %v112
  %v317 = vunpack.c.l.b16 %v113
  %v318 = vunpack.c.l.b16 %v114
  %v319 = vunpack.c.l.b16 %v115
  %v320 = vunpack.c.l.b16 %v116
  %v321 = vunpack.c.l.b16 %v117
  %v322 = vunpack.c.l.b16 %v118
  %v323 = vpack.c.b16 %v226, %v225
  %v324 = vpack.c.b16 %v228, %v227
  %v325 = vpack.c.b16 %v230, %v229
  %v326 = vpack.c.b16 %v232, %v231
  %v327 = vpack.c.b16 %v234, %v233
  %v328 = vpack.c.b16 %v236, %v235
  %v329 = vpack.c.b16 %v238, %v237
  %v330 = vpack.c.b16 %v240, %v239
  %v331 = vpack.c.b16 %v242, %v241
  %v332 = vpack.c.b16 %v244, %v243
  %v333 = vpack.c.b16 %v246, %v245
  %v334 = vpack.c.b16 %v248, %v247
  %v335 = vpack.c.b16 %v250, %v249
  %v336 = vpack.c.b16 %v252, %v251
  %v337 = vpack.c.b16 %v254, %v253
  %v338 = vpack.c.b16 %v256, %v255
  %v339 = vpack.c.b16 %v258, %v257
  %v340 = vpack.c.b16 %v260, %v259
  %v341 = vpack.c.b16 %v262, %v261
  %v342 = vpack.c.b16 %v264, %v263
  %v343 = vpack.c.b16 %v266, %v265
  %v344 = vpack.c.b16 %v268, %v267
  %v345 = vpack.c.b16 %v270, %v269
  %v346 = vpack.c.b16 %v272, %v271
  %v347 = vpack.c.b16 %v274, %v273
  %v348 = vpack.c.b16 %v276, %v275
  %v349 = vpack.c.b16 %v278, %v277
  %v350 = vpack.c.b16 %v280, %v279
  %v351 = vpack.c.b16 %v282, %v281
  %v352 = vpack.c.b16 %v284, %v283
  %v353 = vpack.c.b16 %v286, %v285
  %v354 = vpack.c.b16 %v288, %v287
  %v355 = vpack.c.b16 %v290, %v289
  %v356 = vpack.c.b16 %v292, %v291
  %v357 = vpack.c.b16 %v294, %v293
  %v358 = vpack.c.b16 %v296, %v295
  %v359 = vpack.c.b16 %v298, %v297
  %v360 = vpack.c.b16 %v300, %v299
  %v361 = vpack.c.b16 %v302, %v301
  %v362 = vpack.c.b16 %v304, %v303
  %v363 = vpack.c.b16 %v306, %v305
  %v364 = vpack.c.b16 %v308, %v307
  %v365 = vpack.c.b16 %v310, %v309
  %v366 = vpack.c.b16 %v312, %v311
  %v367 = vpack.c.b16 %v314, %v313
  %v368 = vpack.c.b16 %v316, %v315
  %v369 = vpack.c.b16 %v318, %v317
  %v370 = vpack.c.b16 %v320, %v319
  %v371 = vpack.c.b16 %v322, %v321
  %v376 = vunpack.c.l.b16 %v119
  %v377 = vunpack.c.l.b16 %v120
  %v378 = vunpack.c.l.b16 %v121
  %v379 = vunpack.c.l.b16 %v122
  %v380 = vpack.c.b16 %v377, %v376
  %v381 = vpack.c.b16 %v379, %v378
  %vm384 = vcmask 261120
  %v386 = vsel %vm384, %v323, 0
  %v389 = vsel %vm384, %v324, 0
  %v392 = vsel %vm384, %v325, 0
  %v395 = vsel %vm384, %v326, 0
  %v398 = vsel %vm384, %v327, 0
  %v401 = vsel %vm384, %v328, 0
  %v404 = vsel %vm384, %v329, 0
  %v407 = vsel %vm384, %v330, 0
  %v410 = vsel %vm384, %v331, 0
  %v413 = vsel %vm384, %v332, 0
  %v416 = vsel %vm384, %v333, 0
  %v419 = vsel %vm384, %v334, 0
  %v422 = vsel %vm384, %v335, 0
  %v425 = vsel %vm384, %v336, 0
  %v428 = vsel %vm384, %v337, 0
  %v431 = vsel %vm384, %v338, 0
  %v434 = vsel %vm384, %v339, 0
  %v437 = vsel %vm384, %v340, 0
  %v440 = vsel %vm384, %v341, 0
  %v443 = vsel %vm384, %v342, 0
  %v446 = vsel %vm384, %v343, 0
  %v449 = vsel %vm384, %v344, 0
  %v452 = vsel %vm384, %v345, 0
  %v455 = vsel %vm384, %v346, 0
  %v458 = vsel %vm384, %v347, 0
  %v461 = vsel %vm384, %v348, 0
  %v464 = vsel %vm384, %v349, 0
  %v467 = vsel %vm384, %v350, 0
  %v470 = vsel %vm384, %v351, 0
  %v473 = vsel %vm384, %v352, 0
  %v476 = vsel %vm384, %v353, 0
  %v479 = vsel %vm384, %v354, 0
  %v482 = vsel %vm384, %v355, 0
  %v485 = vsel %vm384, %v356, 0
  %v488 = vsel %vm384, %v357, 0
  %v491 = vsel %vm384, %v358, 0
  %v494 = vsel %vm384, %v359, 0
  %v497 = vsel %vm384, %v360, 0
  %v500 = vsel %vm384, %v361, 0
  %v503 = vsel %vm384, %v362, 0
  %v506 = vsel %vm384, %v363, 0
  %v509 = vsel %vm384, %v364, 0
  %v512 = vsel %vm384, %v365, 0
  %v515 = vsel %vm384, %v366, 0
  %v518 = vsel %vm384, %v367, 0
  %v521 = vsel %vm384, %v368, 0
  %v524 = vsel %vm384, %v369, 0
  %v527 = vsel %vm384, %v370, 0
  %v530 = vsel %vm384, %v371, 0
  %532 = vmatpush.bf16.msra.mxu0 0
  %533 = vmatpush.bf16.msra.mxu0 0
  %534 = vmatpush.bf16.msra.mxu0 0
  %535 = vmatpush.bf16.msra.mxu0 0
  %536 = vmatpush.bf16.msra.mxu0 0
  %537 = vmatpush.bf16.msra.mxu0 0
  %538 = vmatpush.bf16.msra.mxu0 %v381
  %539 = vmatpush.bf16.msra.mxu0 %v380
  %540 = vmatmul.bf16.gmra.mxu0 %v386
  %v541 = vpop.f32.mrf.mxu0
  %v542 = vadd.f32 %v125, %v541
  %v543 = vpop.f32.mrf.mxu0
  %v544 = vadd.f32 %v125, %v543
  %545 = vmatmul.bf16.gmra.mxu0 %v389
  %v546 = vpop.f32.mrf.mxu0
  %v547 = vadd.f32 %v125, %v546
  %v548 = vpop.f32.mrf.mxu0
  %v549 = vadd.f32 %v125, %v548
  %550 = vmatmul.bf16.gmra.mxu0 %v392
  %v551 = vpop.f32.mrf.mxu0
  %v552 = vadd.f32 %v125, %v551
  %v553 = vpop.f32.mrf.mxu0
  %v554 = vadd.f32 %v125, %v553
  %555 = vmatmul.bf16.gmra.mxu0 %v395
  %v556 = vpop.f32.mrf.mxu0
  %v557 = vadd.f32 %v125, %v556
  %v558 = vpop.f32.mrf.mxu0
  %v559 = vadd.f32 %v125, %v558
  %560 = vmatmul.bf16.gmra.mxu0 %v398
  %v561 = vpop.f32.mrf.mxu0
  %v562 = vadd.f32 %v125, %v561
  %v563 = vpop.f32.mrf.mxu0
  %v564 = vadd.f32 %v125, %v563
  %565 = vmatmul.bf16.gmra.mxu0 %v401
  %v566 = vpop.f32.mrf.mxu0
  %v567 = vadd.f32 %v125, %v566
  %v568 = vpop.f32.mrf.mxu0
  %v569 = vadd.f32 %v125, %v568
  %570 = vmatmul.bf16.gmra.mxu0 %v404
  %v571 = vpop.f32.mrf.mxu0
  %v572 = vadd.f32 %v125, %v571
  %v573 = vpop.f32.mrf.mxu0
  %v574 = vadd.f32 %v125, %v573
  %575 = vmatmul.bf16.gmra.mxu0 %v407
  %v576 = vpop.f32.mrf.mxu0
  %v577 = vadd.f32 %v125, %v576
  %v578 = vpop.f32.mrf.mxu0
  %v579 = vadd.f32 %v125, %v578
  %580 = vmatmul.bf16.gmra.mxu0 %v410
  %v581 = vpop.f32.mrf.mxu0
  %v582 = vadd.f32 %v125, %v581
  %v583 = vpop.f32.mrf.mxu0
  %v584 = vadd.f32 %v125, %v583
  %585 = vmatmul.bf16.gmra.mxu0 %v413
  %v586 = vpop.f32.mrf.mxu0
  %v587 = vadd.f32 %v125, %v586
  %v588 = vpop.f32.mrf.mxu0
  %v589 = vadd.f32 %v125, %v588
  %590 = vmatmul.bf16.gmra.mxu0 %v416
  %v591 = vpop.f32.mrf.mxu0
  %v592 = vadd.f32 %v125, %v591
  %v593 = vpop.f32.mrf.mxu0
  %v594 = vadd.f32 %v125, %v593
  %595 = vmatmul.bf16.gmra.mxu0 %v419
  %v596 = vpop.f32.mrf.mxu0
  %v597 = vadd.f32 %v125, %v596
  %v598 = vpop.f32.mrf.mxu0
  %v599 = vadd.f32 %v125, %v598
  %600 = vmatmul.bf16.gmra.mxu0 %v422
  %v601 = vpop.f32.mrf.mxu0
  %v602 = vadd.f32 %v125, %v601
  %v603 = vpop.f32.mrf.mxu0
  %v604 = vadd.f32 %v125, %v603
  %605 = vmatmul.bf16.gmra.mxu0 %v425
  %v606 = vpop.f32.mrf.mxu0
  %v607 = vadd.f32 %v125, %v606
  %v608 = vpop.f32.mrf.mxu0
  %v609 = vadd.f32 %v125, %v608
  %610 = vmatmul.bf16.gmra.mxu0 %v428
  %v611 = vpop.f32.mrf.mxu0
  %v612 = vadd.f32 %v125, %v611
  %v613 = vpop.f32.mrf.mxu0
  %v614 = vadd.f32 %v125, %v613
  %615 = vmatmul.bf16.gmra.mxu0 %v431
  %v616 = vpop.f32.mrf.mxu0
  %v617 = vadd.f32 %v125, %v616
  %v618 = vpop.f32.mrf.mxu0
  %v619 = vadd.f32 %v125, %v618
  %620 = vmatmul.bf16.gmra.mxu0 %v434
  %v621 = vpop.f32.mrf.mxu0
  %v622 = vadd.f32 %v125, %v621
  %v623 = vpop.f32.mrf.mxu0
  %v624 = vadd.f32 %v125, %v623
  %625 = vmatmul.bf16.gmra.mxu0 %v437
  %v626 = vpop.f32.mrf.mxu0
  %v627 = vadd.f32 %v125, %v626
  %v628 = vpop.f32.mrf.mxu0
  %v629 = vadd.f32 %v125, %v628
  %630 = vmatmul.bf16.gmra.mxu0 %v440
  %v631 = vpop.f32.mrf.mxu0
  %v632 = vadd.f32 %v125, %v631
  %v633 = vpop.f32.mrf.mxu0
  %v634 = vadd.f32 %v125, %v633
  %635 = vmatmul.bf16.gmra.mxu0 %v443
  %v636 = vpop.f32.mrf.mxu0
  %v637 = vadd.f32 %v125, %v636
  %v638 = vpop.f32.mrf.mxu0
  %v639 = vadd.f32 %v125, %v638
  %640 = vmatmul.bf16.gmra.mxu0 %v446
  %v641 = vpop.f32.mrf.mxu0
  %v642 = vadd.f32 %v125, %v641
  %v643 = vpop.f32.mrf.mxu0
  %v644 = vadd.f32 %v125, %v643
  %645 = vmatmul.bf16.gmra.mxu0 %v449
  %v646 = vpop.f32.mrf.mxu0
  %v647 = vadd.f32 %v125, %v646
  %v648 = vpop.f32.mrf.mxu0
  %v649 = vadd.f32 %v125, %v648
  %650 = vmatmul.bf16.gmra.mxu0 %v452
  %v651 = vpop.f32.mrf.mxu0
  %v652 = vadd.f32 %v125, %v651
  %v653 = vpop.f32.mrf.mxu0
  %v654 = vadd.f32 %v125, %v653
  %655 = vmatmul.bf16.gmra.mxu0 %v455
  %v656 = vpop.f32.mrf.mxu0
  %v657 = vadd.f32 %v125, %v656
  %v658 = vpop.f32.mrf.mxu0
  %v659 = vadd.f32 %v125, %v658
  %660 = vmatmul.bf16.gmra.mxu0 %v458
  %v661 = vpop.f32.mrf.mxu0
  %v662 = vadd.f32 %v125, %v661
  %v663 = vpop.f32.mrf.mxu0
  %v664 = vadd.f32 %v125, %v663
  %665 = vmatmul.bf16.gmra.mxu0 %v461
  %v666 = vpop.f32.mrf.mxu0
  %v667 = vadd.f32 %v125, %v666
  %v668 = vpop.f32.mrf.mxu0
  %v669 = vadd.f32 %v125, %v668
  %670 = vmatmul.bf16.gmra.mxu0 %v464
  %v671 = vpop.f32.mrf.mxu0
  %v672 = vadd.f32 %v125, %v671
  %v673 = vpop.f32.mrf.mxu0
  %v674 = vadd.f32 %v125, %v673
  %675 = vmatmul.bf16.gmra.mxu0 %v467
  %v676 = vpop.f32.mrf.mxu0
  %v677 = vadd.f32 %v125, %v676
  %v678 = vpop.f32.mrf.mxu0
  %v679 = vadd.f32 %v125, %v678
  %680 = vmatmul.bf16.gmra.mxu0 %v470
  %v681 = vpop.f32.mrf.mxu0
  %v682 = vadd.f32 %v125, %v681
  %v683 = vpop.f32.mrf.mxu0
  %v684 = vadd.f32 %v125, %v683
  %685 = vmatmul.bf16.gmra.mxu0 %v473
  %v686 = vpop.f32.mrf.mxu0
  %v687 = vadd.f32 %v125, %v686
  %v688 = vpop.f32.mrf.mxu0
  %v689 = vadd.f32 %v125, %v688
  %690 = vmatmul.bf16.gmra.mxu0 %v476
  %v691 = vpop.f32.mrf.mxu0
  %v692 = vadd.f32 %v125, %v691
  %v693 = vpop.f32.mrf.mxu0
  %v694 = vadd.f32 %v125, %v693
  %695 = vmatmul.bf16.gmra.mxu0 %v479
  %v696 = vpop.f32.mrf.mxu0
  %v697 = vadd.f32 %v125, %v696
  %v698 = vpop.f32.mrf.mxu0
  %v699 = vadd.f32 %v125, %v698
  %700 = vmatmul.bf16.gmra.mxu0 %v482
  %v701 = vpop.f32.mrf.mxu0
  %v702 = vadd.f32 %v125, %v701
  %v703 = vpop.f32.mrf.mxu0
  %v704 = vadd.f32 %v125, %v703
  %705 = vmatmul.bf16.gmra.mxu0 %v485
  %v706 = vpop.f32.mrf.mxu0
  %v707 = vadd.f32 %v125, %v706
  %v708 = vpop.f32.mrf.mxu0
  %v709 = vadd.f32 %v125, %v708
  %710 = vmatmul.bf16.gmra.mxu0 %v488
  %v711 = vpop.f32.mrf.mxu0
  %v712 = vadd.f32 %v125, %v711
  %v713 = vpop.f32.mrf.mxu0
  %v714 = vadd.f32 %v125, %v713
  %715 = vmatmul.bf16.gmra.mxu0 %v491
  %v716 = vpop.f32.mrf.mxu0
  %v717 = vadd.f32 %v125, %v716
  %v718 = vpop.f32.mrf.mxu0
  %v719 = vadd.f32 %v125, %v718
  %720 = vmatmul.bf16.gmra.mxu0 %v494
  %v721 = vpop.f32.mrf.mxu0
  %v722 = vadd.f32 %v125, %v721
  %v723 = vpop.f32.mrf.mxu0
  %v724 = vadd.f32 %v125, %v723
  %725 = vmatmul.bf16.gmra.mxu0 %v497
  %v726 = vpop.f32.mrf.mxu0
  %v727 = vadd.f32 %v125, %v726
  %v728 = vpop.f32.mrf.mxu0
  %v729 = vadd.f32 %v125, %v728
  %730 = vmatmul.bf16.gmra.mxu0 %v500
  %v731 = vpop.f32.mrf.mxu0
  %v732 = vadd.f32 %v125, %v731
  %v733 = vpop.f32.mrf.mxu0
  %v734 = vadd.f32 %v125, %v733
  %735 = vmatmul.bf16.gmra.mxu0 %v503
  %v736 = vpop.f32.mrf.mxu0
  %v737 = vadd.f32 %v125, %v736
  %v738 = vpop.f32.mrf.mxu0
  %v739 = vadd.f32 %v125, %v738
  %740 = vmatmul.bf16.gmra.mxu0 %v506
  %v741 = vpop.f32.mrf.mxu0
  %v742 = vadd.f32 %v125, %v741
  %v743 = vpop.f32.mrf.mxu0
  %v744 = vadd.f32 %v125, %v743
  %745 = vmatmul.bf16.gmra.mxu0 %v509
  %v746 = vpop.f32.mrf.mxu0
  %v747 = vadd.f32 %v125, %v746
  %v748 = vpop.f32.mrf.mxu0
  %v749 = vadd.f32 %v125, %v748
  %750 = vmatmul.bf16.gmra.mxu0 %v512
  %v751 = vpop.f32.mrf.mxu0
  %v752 = vadd.f32 %v125, %v751
  %v753 = vpop.f32.mrf.mxu0
  %v754 = vadd.f32 %v125, %v753
  %755 = vmatmul.bf16.gmra.mxu0 %v515
  %v756 = vpop.f32.mrf.mxu0
  %v757 = vadd.f32 %v125, %v756
  %v758 = vpop.f32.mrf.mxu0
  %v759 = vadd.f32 %v125, %v758
  %760 = vmatmul.bf16.gmra.mxu0 %v518
  %v761 = vpop.f32.mrf.mxu0
  %v762 = vadd.f32 %v125, %v761
  %v763 = vpop.f32.mrf.mxu0
  %v764 = vadd.f32 %v125, %v763
  %765 = vmatmul.bf16.gmra.mxu0 %v521
  %v766 = vpop.f32.mrf.mxu0
  %v767 = vadd.f32 %v125, %v766
  %v768 = vpop.f32.mrf.mxu0
  %v769 = vadd.f32 %v125, %v768
  %770 = vmatmul.bf16.gmra.mxu0 %v524
  %v771 = vpop.f32.mrf.mxu0
  %v772 = vadd.f32 %v125, %v771
  %v773 = vpop.f32.mrf.mxu0
  %v774 = vadd.f32 %v125, %v773
  %775 = vmatmul.bf16.gmra.mxu0 %v527
  %v776 = vpop.f32.mrf.mxu0
  %v777 = vadd.f32 %v125, %v776
  %v778 = vpop.f32.mrf.mxu0
  %v779 = vadd.f32 %v125, %v778
  %780 = vmatmul.bf16.gmra.mxu0 %v530
  %v781 = vpop.f32.mrf.mxu0
  %v782 = vadd.f32 %v125, %v781
  %v783 = vpop.f32.mrf.mxu0
  %v784 = vadd.f32 %v125, %v783
  %785 = vdwg.mxu0
  %v786 = vmax.f32 %v542, 0.0
  %v787 = vmax.f32 %v544, 0.0
  %v788 = vmax.f32 %v547, 0.0
  %v789 = vmax.f32 %v549, 0.0
  %v790 = vmax.f32 %v552, 0.0
  %v791 = vmax.f32 %v554, 0.0
  %v792 = vmax.f32 %v557, 0.0
  %v793 = vmax.f32 %v559, 0.0
  %v794 = vmax.f32 %v562, 0.0
  %v795 = vmax.f32 %v564, 0.0
  %v796 = vmax.f32 %v567, 0.0
  %v797 = vmax.f32 %v569, 0.0
  %v798 = vmax.f32 %v572, 0.0
  %v799 = vmax.f32 %v574, 0.0
  %v800 = vmax.f32 %v577, 0.0
  %v801 = vmax.f32 %v579, 0.0
  %v802 = vmax.f32 %v582, 0.0
  %v803 = vmax.f32 %v584, 0.0
  %v804 = vmax.f32 %v587, 0.0
  %v805 = vmax.f32 %v589, 0.0
  %v806 = vmax.f32 %v592, 0.0
  %v807 = vmax.f32 %v594, 0.0
  %v808 = vmax.f32 %v597, 0.0
  %v809 = vmax.f32 %v599, 0.0
  %v810 = vmax.f32 %v602, 0.0
  %v811 = vmax.f32 %v604, 0.0
  %v812 = vmax.f32 %v607, 0.0
  %v813 = vmax.f32 %v609, 0.0
  %v814 = vmax.f32 %v612, 0.0
  %v815 = vmax.f32 %v614, 0.0
  %v816 = vmax.f32 %v617, 0.0
  %v817 = vmax.f32 %v619, 0.0
  %v818 = vmax.f32 %v622, 0.0
  %v819 = vmax.f32 %v624, 0.0
  %v820 = vmax.f32 %v627, 0.0
  %v821 = vmax.f32 %v629, 0.0
  %v822 = vmax.f32 %v632, 0.0
  %v823 = vmax.f32 %v634, 0.0
  %v824 = vmax.f32 %v637, 0.0
  %v825 = vmax.f32 %v639, 0.0
  %v826 = vmax.f32 %v642, 0.0
  %v827 = vmax.f32 %v644, 0.0
  %v828 = vmax.f32 %v647, 0.0
  %v829 = vmax.f32 %v649, 0.0
  %v830 = vmax.f32 %v652, 0.0
  %v831 = vmax.f32 %v654, 0.0
  %v832 = vmax.f32 %v657, 0.0
  %v833 = vmax.f32 %v659, 0.0
  %v834 = vmax.f32 %v662, 0.0
  %v835 = vmax.f32 %v664, 0.0
  %v836 = vmax.f32 %v667, 0.0
  %v837 = vmax.f32 %v669, 0.0
  %v838 = vmax.f32 %v672, 0.0
  %v839 = vmax.f32 %v674, 0.0
  %v840 = vmax.f32 %v677, 0.0
  %v841 = vmax.f32 %v679, 0.0
  %v842 = vmax.f32 %v682, 0.0
  %v843 = vmax.f32 %v684, 0.0
  %v844 = vmax.f32 %v687, 0.0
  %v845 = vmax.f32 %v689, 0.0
  %v846 = vmax.f32 %v692, 0.0
  %v847 = vmax.f32 %v694, 0.0
  %v848 = vmax.f32 %v697, 0.0
  %v849 = vmax.f32 %v699, 0.0
  %v850 = vmax.f32 %v702, 0.0
  %v851 = vmax.f32 %v704, 0.0
  %v852 = vmax.f32 %v707, 0.0
  %v853 = vmax.f32 %v709, 0.0
  %v854 = vmax.f32 %v712, 0.0
  %v855 = vmax.f32 %v714, 0.0
  %v856 = vmax.f32 %v717, 0.0
  %v857 = vmax.f32 %v719, 0.0
  %v858 = vmax.f32 %v722, 0.0
  %v859 = vmax.f32 %v724, 0.0
  %v860 = vmax.f32 %v727, 0.0
  %v861 = vmax.f32 %v729, 0.0
  %v862 = vmax.f32 %v732, 0.0
  %v863 = vmax.f32 %v734, 0.0
  %v864 = vmax.f32 %v737, 0.0
  %v865 = vmax.f32 %v739, 0.0
  %v866 = vmax.f32 %v742, 0.0
  %v867 = vmax.f32 %v744, 0.0
  %v868 = vmax.f32 %v747, 0.0
  %v869 = vmax.f32 %v749, 0.0
  %v870 = vmax.f32 %v752, 0.0
  %v871 = vmax.f32 %v754, 0.0
  %v872 = vmax.f32 %v757, 0.0
  %v873 = vmax.f32 %v759, 0.0
  %v874 = vmax.f32 %v762, 0.0
  %v875 = vmax.f32 %v764, 0.0
  %v876 = vmax.f32 %v767, 0.0
  %v877 = vmax.f32 %v769, 0.0
  %v878 = vmax.f32 %v772, 0.0
  %v879 = vmax.f32 %v774, 0.0
  %v880 = vmax.f32 %v777, 0.0
  %v881 = vmax.f32 %v779, 0.0
  %v882 = vmax.f32 %v782, 0.0
  %v883 = vmax.f32 %v784, 0.0
  %v884 = vld [vmem:[%s3] sm:$0x7f]
  %v885 = vpack.c.bf16 %v787, %v786
  %v886 = vpack.c.bf16 %v789, %v788
  %v887 = vpack.c.bf16 %v791, %v790
  %v888 = vpack.c.bf16 %v793, %v792
  %v889 = vpack.c.bf16 %v795, %v794
  %v890 = vpack.c.bf16 %v797, %v796
  %v891 = vpack.c.bf16 %v799, %v798
  %v892 = vpack.c.bf16 %v801, %v800
  %v893 = vpack.c.bf16 %v803, %v802
  %v894 = vpack.c.bf16 %v805, %v804
  %v895 = vpack.c.bf16 %v807, %v806
  %v896 = vpack.c.bf16 %v809, %v808
  %v897 = vpack.c.bf16 %v811, %v810
  %v898 = vpack.c.bf16 %v813, %v812
  %v899 = vpack.c.bf16 %v815, %v814
  %v900 = vpack.c.bf16 %v817, %v816
  %v901 = vpack.c.bf16 %v819, %v818
  %v902 = vpack.c.bf16 %v821, %v820
  %v903 = vpack.c.bf16 %v823, %v822
  %v904 = vpack.c.bf16 %v825, %v824
  %v905 = vpack.c.bf16 %v827, %v826
  %v906 = vpack.c.bf16 %v829, %v828
  %v907 = vpack.c.bf16 %v831, %v830
  %v908 = vpack.c.bf16 %v833, %v832
  %v909 = vpack.c.bf16 %v835, %v834
  %v910 = vpack.c.bf16 %v837, %v836
  %v911 = vpack.c.bf16 %v839, %v838
  %v912 = vpack.c.bf16 %v841, %v840
  %v913 = vpack.c.bf16 %v843, %v842
  %v914 = vpack.c.bf16 %v845, %v844
  %v915 = vpack.c.bf16 %v847, %v846
  %v916 = vpack.c.bf16 %v849, %v848
  %v917 = vpack.c.bf16 %v851, %v850
  %v918 = vpack.c.bf16 %v853, %v852
  %v919 = vpack.c.bf16 %v855, %v854
  %v920 = vpack.c.bf16 %v857, %v856
  %v921 = vpack.c.bf16 %v859, %v858
  %v922 = vpack.c.bf16 %v861, %v860
  %v923 = vpack.c.bf16 %v863, %v862
  %v924 = vpack.c.bf16 %v865, %v864
  %v925 = vpack.c.bf16 %v867, %v866
  %v926 = vpack.c.bf16 %v869, %v868
  %v927 = vpack.c.bf16 %v871, %v870
  %v928 = vpack.c.bf16 %v873, %v872
  %v929 = vpack.c.bf16 %v875, %v874
  %v930 = vpack.c.bf16 %v877, %v876
  %v931 = vpack.c.bf16 %v879, %v878
  %v932 = vpack.c.bf16 %v881, %v880
  %v933 = vpack.c.bf16 %v883, %v882
  %935 = vst [vmem:[#allocation1] ss:$9 sm:$0xff] %v884
  %v936 = vld [vmem:[#allocation1] sm:$0xff]
  %v937 = vld [vmem:[#allocation1 + $0x9] sm:$0xff]
  %v938 = vld [vmem:[#allocation1 + $0x12] sm:$0xff]
  %v939 = vld [vmem:[#allocation1 + $0x1b] sm:$0xff]
  %v940 = vld [vmem:[#allocation1 + $0x24] sm:$0xff]
  %v941 = vld [vmem:[#allocation1 + $0x2d] sm:$0xff]
  %v942 = vld [vmem:[#allocation1 + $0x36] sm:$0xff]
  %vm949 = vcmask 130048
  %v950 = vsel %vm949, %v942, 0
  %952 = vmatpush.bf16.msra.mxu0 %v892
  %953 = vmatpush.bf16.msra.mxu0 %v891
  %954 = vmatpush.bf16.msra.mxu0 %v890
  %955 = vmatpush.bf16.msra.mxu0 %v889
  %956 = vmatpush.bf16.msra.mxu0 %v888
  %957 = vmatpush.bf16.msra.mxu0 %v887
  %958 = vmatpush.bf16.msra.mxu0 %v886
  %959 = vmatpush.bf16.msra.mxu0 %v885
  %960 = vmatmul.bf16.gmra.mxu0 %v936
  %v961 = vpop.f32.mrf.mxu0
  %v962 = vadd.f32 0.0, %v961
  %v963 = vpop.f32.mrf.mxu0
  %964 = vdwg.mxu0
  %965 = vmatpush.bf16.msra.mxu0 %v900
  %966 = vmatpush.bf16.msra.mxu0 %v899
  %967 = vmatpush.bf16.msra.mxu0 %v898
  %968 = vmatpush.bf16.msra.mxu0 %v897
  %969 = vmatpush.bf16.msra.mxu0 %v896
  %970 = vmatpush.bf16.msra.mxu0 %v895
  %971 = vmatpush.bf16.msra.mxu0 %v894
  %972 = vmatpush.bf16.msra.mxu0 %v893
  %973 = vmatmul.bf16.gmra.mxu0 %v937
  %v974 = vpop.f32.mrf.mxu0
  %v975 = vadd.f32 %v962, %v974
  %v976 = vpop.f32.mrf.mxu0
  %977 = vdwg.mxu0
  %978 = vmatpush.bf16.msra.mxu0 %v908
  %979 = vmatpush.bf16.msra.mxu0 %v907
  %980 = vmatpush.bf16.msra.mxu0 %v906
  %981 = vmatpush.bf16.msra.mxu0 %v905
  %982 = vmatpush.bf16.msra.mxu0 %v904
  %983 = vmatpush.bf16.msra.mxu0 %v903
  %984 = vmatpush.bf16.msra.mxu0 %v902
  %985 = vmatpush.bf16.msra.mxu0 %v901
  %986 = vmatmul.bf16.gmra.mxu0 %v938
  %v987 = vpop.f32.mrf.mxu0
  %v988 = vadd.f32 %v975, %v987
  %v989 = vpop.f32.mrf.mxu0
  %990 = vdwg.mxu0
  %991 = vmatpush.bf16.msra.mxu0 %v916
  %992 = vmatpush.bf16.msra.mxu0 %v915
  %993 = vmatpush.bf16.msra.mxu0 %v914
  %994 = vmatpush.bf16.msra.mxu0 %v913
  %995 = vmatpush.bf16.msra.mxu0 %v912
  %996 = vmatpush.bf16.msra.mxu0 %v911
  %997 = vmatpush.bf16.msra.mxu0 %v910
  %998 = vmatpush.bf16.msra.mxu0 %v909
  %999 = vmatmul.bf16.gmra.mxu0 %v939
  %v1000 = vpop.f32.mrf.mxu0
  %v1001 = vadd.f32 %v988, %v1000
  %v1002 = vpop.f32.mrf.mxu0
  %1003 = vdwg.mxu0
  %1004 = vmatpush.bf16.msra.mxu0 %v924
  %1005 = vmatpush.bf16.msra.mxu0 %v923
  %1006 = vmatpush.bf16.msra.mxu0 %v922
  %1007 = vmatpush.bf16.msra.mxu0 %v921
  %1008 = vmatpush.bf16.msra.mxu0 %v920
  %1009 = vmatpush.bf16.msra.mxu0 %v919
  %1010 = vmatpush.bf16.msra.mxu0 %v918
  %1011 = vmatpush.bf16.msra.mxu0 %v917
  %1012 = vmatmul.bf16.gmra.mxu0 %v940
  %v1013 = vpop.f32.mrf.mxu0
  %v1014 = vadd.f32 %v1001, %v1013
  %v1015 = vpop.f32.mrf.mxu0
  %1016 = vdwg.mxu0
  %1017 = vmatpush.bf16.msra.mxu0 %v932
  %1018 = vmatpush.bf16.msra.mxu0 %v931
  %1019 = vmatpush.bf16.msra.mxu0 %v930
  %1020 = vmatpush.bf16.msra.mxu0 %v929
  %1021 = vmatpush.bf16.msra.mxu0 %v928
  %1022 = vmatpush.bf16.msra.mxu0 %v927
  %1023 = vmatpush.bf16.msra.mxu0 %v926
  %1024 = vmatpush.bf16.msra.mxu0 %v925
  %1025 = vmatmul.bf16.gmra.mxu0 %v941
  %v1026 = vpop.f32.mrf.mxu0
  %v1027 = vadd.f32 %v1014, %v1026
  %v1028 = vpop.f32.mrf.mxu0
  %1029 = vdwg.mxu0
  %1030 = vmatpush.bf16.msra.mxu0 0
  %1031 = vmatpush.bf16.msra.mxu0 0
  %1032 = vmatpush.bf16.msra.mxu0 0
  %1033 = vmatpush.bf16.msra.mxu0 0
  %1034 = vmatpush.bf16.msra.mxu0 0
  %1035 = vmatpush.bf16.msra.mxu0 0
  %1036 = vmatpush.bf16.msra.mxu0 0
  %1037 = vmatpush.bf16.msra.mxu0 %v933
  %1038 = vmatmul.bf16.gmra.mxu0 %v950
  %v1039 = vpop.f32.mrf.mxu0
  %v1040 = vadd.f32 %v1027, %v1039
  %v1041 = vpop.f32.mrf.mxu0
  %1042 = vdwg.mxu0
  %v1043 = vmul.f32 %v1040, 0.0051020407
  %v1044 = vpack.c.bf16 %v1043, %v1043
  %v1045 = vld [vmem:[%s4] sm:$0xf]
  %v1046 = vld [vmem:[%s4 + $0x4] sm:$0xf]
  %v1047 = vld [vmem:[%s4 + $0x8] sm:$0xf]
  %v1048 = vld [vmem:[%s4 + $0xc] sm:$0xf]
  %v1049 = vld [vmem:[%s4 + $0x10] sm:$0xf]
  %v1050 = vld [vmem:[%s4 + $0x14] sm:$0xf]
  %v1051 = vld [vmem:[%s4 + $0x18] sm:$0xf]
  %v1052 = vld [vmem:[%s4 + $0x1c] sm:$0xf]
  %v1053 = vld [vmem:[%s4 + $0x20] sm:$0xf]
  %v1054 = vld [vmem:[%s4 + $0x24] sm:$0xf]
  %v1055 = vld [vmem:[%s4 + $0x28] sm:$0xf]
  %v1056 = vld [vmem:[%s4 + $0x2c] sm:$0xf]
  %v1057 = vld [vmem:[%s4 + $0x30] sm:$0xf]
  %v1058 = vld [vmem:[%s4 + $0x34] sm:$0xf]
  %v1059 = vld [vmem:[%s4 + $0x38] sm:$0xf]
  %v1060 = vld [vmem:[%s4 + $0x3c] sm:$0xf]
  %v1077 = vunpack.c.l.b16 %v1045
  %v1078 = vunpack.c.l.b16 %v1046
  %v1079 = vunpack.c.l.b16 %v1047
  %v1080 = vunpack.c.l.b16 %v1048
  %v1081 = vunpack.c.l.b16 %v1049
  %v1082 = vunpack.c.l.b16 %v1050
  %v1083 = vunpack.c.l.b16 %v1051
  %v1084 = vunpack.c.l.b16 %v1052
  %v1085 = vunpack.c.l.b16 %v1053
  %v1086 = vunpack.c.l.b16 %v1054
  %v1087 = vunpack.c.l.b16 %v1055
  %v1088 = vunpack.c.l.b16 %v1056
  %v1089 = vunpack.c.l.b16 %v1057
  %v1090 = vunpack.c.l.b16 %v1058
  %v1091 = vunpack.c.l.b16 %v1059
  %v1092 = vunpack.c.l.b16 %v1060
  %v1093 = vpack.c.b16 %v1078, %v1077
  %v1094 = vpack.c.b16 %v1080, %v1079
  %v1095 = vpack.c.b16 %v1082, %v1081
  %v1096 = vpack.c.b16 %v1084, %v1083
  %v1097 = vpack.c.b16 %v1086, %v1085
  %v1098 = vpack.c.b16 %v1088, %v1087
  %v1099 = vpack.c.b16 %v1090, %v1089
  %v1100 = vpack.c.b16 %v1092, %v1091
  %1109 = vmatpush.bf16.msra.mxu0 %v1100
  %1110 = vmatpush.bf16.msra.mxu0 %v1099
  %1111 = vmatpush.bf16.msra.mxu0 %v1098
  %1112 = vmatpush.bf16.msra.mxu0 %v1097
  %1113 = vmatpush.bf16.msra.mxu0 %v1096
  %1114 = vmatpush.bf16.msra.mxu0 %v1095
  %1115 = vmatpush.bf16.msra.mxu0 %v1094
  %1116 = vmatpush.bf16.msra.mxu0 %v1093
  %1117 = vmatmul.bf16.gmra.mxu0 %v1044
  %v1118 = vpop.f32.mrf.mxu0
  %v1119 = vadd.f32 1e-06, %v1118
  %v1120 = vpop.f32.mrf.mxu0
  %1121 = vdwg.mxu0
  %v1122 = vand.u32 2147483647, %v1119
  %vm1123 = vcmask 254976
  %v1124 = vsel %vm1123, %v1122, 0.0
  %1125 = vadd.xlane.f32.xlu0 %v1124
  %v1126 = vpop.xlane.xlu0 %1125
  %v1127 = vrsqrt.pop %v1126
  %v1128 = vmul.f32 %v1127, %v1126
  %v1129 = vmul.f32 %v1128, %v1127
  %v1130 = vmul.f32 0.5, %v1129
  %v1131 = vsub.f32 1.5, %v1130
  %v1132 = vmul.f32 %v1127, %v1131
  %v1133 = vmul.f32 %v1126, %v1132
  %vm1134 = vcmp.eq.f32.partialorder %v1126, inf
  %v1135 = vsel %vm1134, %v1126, %v1133
  %vm1136 = vcmp.eq.f32.partialorder %v1126, 0.0
  %v1137 = vand.u32 %v1126, 2147483648
  %v1138 = vsel %vm1136, %v1137, %v1135
  %v1139 = vsub.f32 0.0, %v1138
  %v1140 = vmul.f32 %v1139, 1.442695
  %v1141 = vpow.pop %v1140
  %v1142 = vsub.f32 1.0, %v1141
  %1143 = vst [vmem:[%s5] sm:$0x3] %v1142
  // Predicated region
  $region22: #{_forward_impl.1} parent=0 // pred_check
    _
  $region23: #{_forward_impl.1} parent=0 // pred_check_branch
    %1145 = sbr.rel (0) target = $region25
  $region24: #{_forward_impl.1} parent=0 // pred_region
    _
  $region25: #{_forward_impl.1} parent=0 // pred_fallthru
    _
  // Predicated region
  $region26: #{_forward_impl.1} parent=0 // pred_check
    _
  $region27: #{_forward_impl.1} parent=0 // pred_check_branch
    %1147 = sbr.rel (0) target = $region29
  $region28: #{_forward_impl.1} parent=0 // pred_region
    _
  $region29: #{_forward_impl.1} parent=0 // pred_fallthru
    _

</llo_original>
